<compile_context>
chip_gen: v5e
topology: v5e:2x2
jax: 0.10.0
libtpu: 0.0.40
codegen_flags: <defaults>
</compile_context>

<pallas_src>
import jax
import jax.numpy as jnp
from jax.experimental import pallas as pl
from jax.experimental.pallas import tpu as pltpu


def _round_up(x, m):
    return ((x + m - 1) // m) * m


def _tensorcores_per_chip():
    """Best-effort TensorCore-per-device count (v7x / megacore = 2). Defaults to 1."""
    try:
        info = pltpu.get_tpu_info()
        for name in ("num_cores", "core_count", "num_tensor_cores",
                     "num_tensorcores", "tensorcore_count"):
            v = getattr(info, name, None)
            if isinstance(v, int) and v > 0:
                return v
    except Exception:
        pass
    try:
        kind = jax.devices()[0].device_kind.lower()
        if any(tok in kind for tok in ("v7x", "tpu7", "7x", "v5p", "v4")):
            return 2
    except Exception:
        pass
    return 1


def mlp_kernel(x_ref,
               w1_ref, b1_ref,
               w2_ref, b2_ref,
               w3_ref, b3_ref,
               w4_ref, b4_ref,
               o_ref):
    # bf16 operands feed the MXU; accumulation + bias/ReLU are f32 on the VPU.
    # Only the bf16 copy of each activation stays live into the next matmul.
    x = x_ref[...].astype(jnp.bfloat16)

    h = jnp.maximum(
        jnp.dot(x, w1_ref[...], preferred_element_type=jnp.float32) + b1_ref[...],
        0.0).astype(jnp.bfloat16)
    h = jnp.maximum(
        jnp.dot(h, w2_ref[...], preferred_element_type=jnp.float32) + b2_ref[...],
        0.0).astype(jnp.bfloat16)
    h = jnp.maximum(
        jnp.dot(h, w3_ref[...], preferred_element_type=jnp.float32) + b3_ref[...],
        0.0).astype(jnp.bfloat16)

    out = jnp.dot(h, w4_ref[...], preferred_element_type=jnp.float32) + b4_ref[...]
    o_ref[...] = out.astype(o_ref.dtype)   # lane-dense (128-wide) unmasked store


def linear_encoder_forward(x, params, *, tile_b=1024):
    """x: (B, input_size). params: dict of (in,out) f32 weights + (1,out) f32 biases."""
    B, in_size = x.shape
    out_size = params["w4"].shape[1]
    n4 = _round_up(out_size, 128)          # lane-dense final layer width

    # bf16 weights for the MXU; biases stay f32 for the VPU bias-add.
    w1 = params["w1"].astype(jnp.bfloat16)
    w2 = params["w2"].astype(jnp.bfloat16)
    w3 = params["w3"].astype(jnp.bfloat16)
    w4 = params["w4"].astype(jnp.bfloat16)
    b1 = params["b1"].astype(jnp.float32)
    b2 = params["b2"].astype(jnp.float32)
    b3 = params["b3"].astype(jnp.float32)
    b4 = params["b4"].astype(jnp.float32)
    if n4 != out_size:                     # zero-pad columns (tiny, one-time)
        w4 = jnp.pad(w4, ((0, 0), (0, n4 - out_size)))
        b4 = jnp.pad(b4, ((0, 0), (0, n4 - out_size)))

    # ---- batch tile (ragged batches handled by Pallas masked last block) ----
    b8 = _round_up(max(B, 1), 8)                       # sublane alignment
    eff_tile = min(_round_up(max(tile_b, 8), 8), b8)   # never bigger than batch
    # Only split the tile when a second TensorCore exists to pick it up.
    if _tensorcores_per_chip() >= 2 and b8 >= 16 and pl.cdiv(B, eff_tile) < 2:
        eff_tile = max(8, _round_up(pl.cdiv(b8, 2), 8))  # balanced 2-way split
    grid = (pl.cdiv(B, eff_tile),)

    def resident_spec(shape):
        # whole-array block, same block index every grid step -> stays in VMEM
        return pl.BlockSpec(shape, lambda i: (0, 0))

    flops = 2 * B * (in_size * 256 + 256 * 128 + 128 * 64 + 64 * n4)
    bytes_accessed = (
        B * in_size * 4 + B * n4 * 4
        + (w1.size + w2.size + w3.size + w4.size) * 2
        + (b1.size + b2.size + b3.size + b4.size) * 4
    )
    cost = pl.CostEstimate(flops=flops, transcendentals=0,
                           bytes_accessed=bytes_accessed)

    out = pl.pallas_call(
        mlp_kernel,
        out_shape=jax.ShapeDtypeStruct((B, n4), jnp.float32),
        grid_spec=pltpu.PrefetchScalarGridSpec(
            num_scalar_prefetch=0,
            grid=grid,
            in_specs=[
                pl.BlockSpec((eff_tile, in_size), lambda i: (i, 0)),   # x tile
                resident_spec(w1.shape), resident_spec(b1.shape),
                resident_spec(w2.shape), resident_spec(b2.shape),
                resident_spec(w3.shape), resident_spec(b3.shape),
                resident_spec(w4.shape), resident_spec(b4.shape),
            ],
            out_specs=pl.BlockSpec((eff_tile, n4), lambda i: (i, 0)),
        ),
        compiler_params=pltpu.CompilerParams(
            dimension_semantics=("parallel",)),
        cost_estimate=cost,
    )(x, w1, b1, w2, b2, w3, b3, w4, b4)

    if n4 != out_size:
        out = out[:, :out_size]
    return out


def init_params(key, input_size, output_size):
    """Deterministic init mirroring nn.Linear default (uniform +/- 1/sqrt(fan_in)).
    Weights stored as (in_features, out_features); biases as (1, out_features)."""
    dims = [(input_size, 256), (256, 128), (128, 64), (64, output_size)]
    params = {}
    for idx, (fan_in, fan_out) in enumerate(dims, start=1):
        key, kw, kb = jax.random.split(key, 3)
        bound = 1.0 / jnp.sqrt(fan_in)
        params[f"w{idx}"] = jax.random.uniform(
            kw, (fan_in, fan_out), jnp.float32, -bound, bound)
        params[f"b{idx}"] = jax.random.uniform(
            kb, (1, fan_out), jnp.float32, -bound, bound)
    return params


def reference_forward(x, params):
    """Pure-JAX reference mirroring the kernel's bf16-operand / f32-accumulate path."""
    def bf(v):
        return v.astype(jnp.bfloat16).astype(jnp.float32)
    h = jnp.maximum(bf(x) @ bf(params["w1"]) + params["b1"], 0.0)
    h = jnp.maximum(bf(h) @ bf(params["w2"]) + params["b2"], 0.0)
    h = jnp.maximum(bf(h) @ bf(params["w3"]) + params["b3"], 0.0)
    return bf(h) @ bf(params["w4"]) + params["b4"]


if __name__ == "__main__":
    input_size = 32
    output_size = 16
    batch = 200   # not a multiple of 128: exercises the ragged last block below

    key = jax.random.PRNGKey(0)
    key, kx = jax.random.split(key)
    x = jax.random.normal(kx, (batch, input_size), jnp.float32)
    params = init_params(key, input_size, output_size)

    ref = reference_forward(x, params)

    # Default path (single large tile, or 2-way split on multi-TC chips).
    out = jax.block_until_ready(linear_encoder_forward(x, params))
    assert out.shape == (batch, output_size)
    assert jnp.allclose(out, ref, atol=1e-2, rtol=1e-2), (
        float(jnp.max(jnp.abs(out - ref))))

    # Multi-step grid with a ragged (masked) last block: 200 rows, 128-row tiles.
    out2 = jax.block_until_ready(linear_encoder_forward(x, params, tile_b=128))
    assert out2.shape == (batch, output_size)
    assert jnp.allclose(out2, ref, atol=1e-2, rtol=1e-2), (
        float(jnp.max(jnp.abs(out2 - ref))))

    print("KERNEL_OK")
</pallas_src>

<mosaic_0001>
module attributes {stable_mosaic.version = 11 : i64} {
  func.func @mlp_kernel(%arg0: i32, %arg1: memref<200x32xf32, #tpu.memory_space<vmem>>, %arg2: memref<32x256xbf16, #tpu.memory_space<vmem>>, %arg3: memref<1x256xf32, #tpu.memory_space<vmem>>, %arg4: memref<256x128xbf16, #tpu.memory_space<vmem>>, %arg5: memref<1x128xf32, #tpu.memory_space<vmem>>, %arg6: memref<128x64xbf16, #tpu.memory_space<vmem>>, %arg7: memref<1x64xf32, #tpu.memory_space<vmem>>, %arg8: memref<64x128xbf16, #tpu.memory_space<vmem>>, %arg9: memref<1x128xf32, #tpu.memory_space<vmem>>, %arg10: memref<200x128xf32, #tpu.memory_space<vmem>>) attributes {dimension_semantics = [#tpu.dimension_semantics<parallel>], iteration_bounds = array<i64: 1>, scalar_prefetch = 0 : i64, scratch_operands = 0 : i64, tpu.core_type = #tpu.core_type<tc>, window_params = [{transform_indices = @transform_0, window_bounds = array<i64: 200, 32>}, {pipeline_mode = #tpu.pipeline_mode<synchronous>, transform_indices = @transform_1, window_bounds = array<i64: 32, 256>}, {pipeline_mode = #tpu.pipeline_mode<synchronous>, transform_indices = @transform_2, window_bounds = array<i64: 1, 256>}, {pipeline_mode = #tpu.pipeline_mode<synchronous>, transform_indices = @transform_3, window_bounds = array<i64: 256, 128>}, {pipeline_mode = #tpu.pipeline_mode<synchronous>, transform_indices = @transform_4, window_bounds = array<i64: 1, 128>}, {pipeline_mode = #tpu.pipeline_mode<synchronous>, transform_indices = @transform_5, window_bounds = array<i64: 128, 64>}, {pipeline_mode = #tpu.pipeline_mode<synchronous>, transform_indices = @transform_6, window_bounds = array<i64: 1, 64>}, {pipeline_mode = #tpu.pipeline_mode<synchronous>, transform_indices = @transform_7, window_bounds = array<i64: 64, 128>}, {pipeline_mode = #tpu.pipeline_mode<synchronous>, transform_indices = @transform_8, window_bounds = array<i64: 1, 128>}, {transform_indices = @transform_9, window_bounds = array<i64: 200, 128>}]} {
    %c0 = arith.constant 0 : index
    %c0_0 = arith.constant 0 : index
    %0 = vector.load %arg1[%c0, %c0_0] : memref<200x32xf32, #tpu.memory_space<vmem>>, vector<200x32xf32>
    %1 = arith.truncf %0 : vector<200x32xf32> to vector<200x32xbf16>
    %c0_1 = arith.constant 0 : index
    %c0_2 = arith.constant 0 : index
    %2 = vector.load %arg2[%c0_1, %c0_2] : memref<32x256xbf16, #tpu.memory_space<vmem>>, vector<32x256xbf16>
    %cst = arith.constant dense<0.000000e+00> : vector<200x256xf32>
    %3 = tpu.matmul %1, %2, %cst {dimension_numbers = #tpu.dot_dimension_numbers<[1], [0], [0], [1], [0, 0, 1, 1], [], []>} : vector<200x32xbf16>, vector<32x256xbf16>, vector<200x256xf32> -> vector<200x256xf32>
    %c0_3 = arith.constant 0 : index
    %c0_4 = arith.constant 0 : index
    %4 = vector.load %arg3[%c0_3, %c0_4] : memref<1x256xf32, #tpu.memory_space<vmem>>, vector<1x256xf32>
    %5 = vector.broadcast %4 : vector<1x256xf32> to vector<200x256xf32>
    %6 = arith.addf %3, %5 : vector<200x256xf32>
    %cst_5 = arith.constant 0.000000e+00 : f32
    %7 = vector.broadcast %cst_5 : f32 to vector<200x256xf32>
    %8 = arith.maximumf %6, %7 : vector<200x256xf32>
    %9 = arith.truncf %8 : vector<200x256xf32> to vector<200x256xbf16>
    %c0_6 = arith.constant 0 : index
    %c0_7 = arith.constant 0 : index
    %10 = vector.load %arg4[%c0_6, %c0_7] : memref<256x128xbf16, #tpu.memory_space<vmem>>, vector<256x128xbf16>
    %cst_8 = arith.constant dense<0.000000e+00> : vector<200x128xf32>
    %11 = tpu.matmul %9, %10, %cst_8 {dimension_numbers = #tpu.dot_dimension_numbers<[1], [0], [0], [1], [0, 0, 1, 1], [], []>} : vector<200x256xbf16>, vector<256x128xbf16>, vector<200x128xf32> -> vector<200x128xf32>
    %c0_9 = arith.constant 0 : index
    %c0_10 = arith.constant 0 : index
    %12 = vector.load %arg5[%c0_9, %c0_10] : memref<1x128xf32, #tpu.memory_space<vmem>>, vector<1x128xf32>
    %13 = vector.broadcast %12 : vector<1x128xf32> to vector<200x128xf32>
    %14 = arith.addf %11, %13 : vector<200x128xf32>
    %cst_11 = arith.constant 0.000000e+00 : f32
    %15 = vector.broadcast %cst_11 : f32 to vector<200x128xf32>
    %16 = arith.maximumf %14, %15 : vector<200x128xf32>
    %17 = arith.truncf %16 : vector<200x128xf32> to vector<200x128xbf16>
    %c0_12 = arith.constant 0 : index
    %c0_13 = arith.constant 0 : index
    %18 = vector.load %arg6[%c0_12, %c0_13] : memref<128x64xbf16, #tpu.memory_space<vmem>>, vector<128x64xbf16>
    %cst_14 = arith.constant dense<0.000000e+00> : vector<200x64xf32>
    %19 = tpu.matmul %17, %18, %cst_14 {dimension_numbers = #tpu.dot_dimension_numbers<[1], [0], [0], [1], [0, 0, 1, 1], [], []>} : vector<200x128xbf16>, vector<128x64xbf16>, vector<200x64xf32> -> vector<200x64xf32>
    %c0_15 = arith.constant 0 : index
    %c0_16 = arith.constant 0 : index
    %20 = vector.load %arg7[%c0_15, %c0_16] : memref<1x64xf32, #tpu.memory_space<vmem>>, vector<1x64xf32>
    %21 = vector.broadcast %20 : vector<1x64xf32> to vector<200x64xf32>
    %22 = arith.addf %19, %21 : vector<200x64xf32>
    %cst_17 = arith.constant 0.000000e+00 : f32
    %23 = vector.broadcast %cst_17 : f32 to vector<200x64xf32>
    %24 = arith.maximumf %22, %23 : vector<200x64xf32>
    %25 = arith.truncf %24 : vector<200x64xf32> to vector<200x64xbf16>
    %c0_18 = arith.constant 0 : index
    %c0_19 = arith.constant 0 : index
    %26 = vector.load %arg8[%c0_18, %c0_19] : memref<64x128xbf16, #tpu.memory_space<vmem>>, vector<64x128xbf16>
    %cst_20 = arith.constant dense<0.000000e+00> : vector<200x128xf32>
    %27 = tpu.matmul %25, %26, %cst_20 {dimension_numbers = #tpu.dot_dimension_numbers<[1], [0], [0], [1], [0, 0, 1, 1], [], []>} : vector<200x64xbf16>, vector<64x128xbf16>, vector<200x128xf32> -> vector<200x128xf32>
    %c0_21 = arith.constant 0 : index
    %c0_22 = arith.constant 0 : index
    %28 = vector.load %arg9[%c0_21, %c0_22] : memref<1x128xf32, #tpu.memory_space<vmem>>, vector<1x128xf32>
    %29 = vector.broadcast %28 : vector<1x128xf32> to vector<200x128xf32>
    %30 = arith.addf %27, %29 : vector<200x128xf32>
    %c0_23 = arith.constant 0 : index
    %c0_24 = arith.constant 0 : index
    %31 = vector.load %arg10[%c0_23, %c0_24] : memref<200x128xf32, #tpu.memory_space<vmem>>, vector<200x128xf32>
    tpu.vector_store %arg10[%c0_23, %c0_24], %30 {strides = array<i32>} : memref<200x128xf32, #tpu.memory_space<vmem>>, vector<200x128xf32>,
    return
  }
  func.func @transform_0(%arg0: i32) -> (i32, i32) {
    %c0_i32 = arith.constant 0 : i32
    %c0_i32_0 = arith.constant 0 : i32
    return %arg0, %c0_i32 : i32, i32
  }
  func.func @transform_1(%arg0: i32) -> (i32, i32) {
    %c0_i32 = arith.constant 0 : i32
    %c0_i32_0 = arith.constant 0 : i32
    %c0_i32_1 = arith.constant 0 : i32
    return %c0_i32, %c0_i32_0 : i32, i32
  }
  func.func @transform_2(%arg0: i32) -> (i32, i32) {
    %c0_i32 = arith.constant 0 : i32
    %c0_i32_0 = arith.constant 0 : i32
    %c0_i32_1 = arith.constant 0 : i32
    return %c0_i32, %c0_i32_0 : i32, i32
  }
  func.func @transform_3(%arg0: i32) -> (i32, i32) {
    %c0_i32 = arith.constant 0 : i32
    %c0_i32_0 = arith.constant 0 : i32
    %c0_i32_1 = arith.constant 0 : i32
    return %c0_i32, %c0_i32_0 : i32, i32
  }
  func.func @transform_4(%arg0: i32) -> (i32, i32) {
    %c0_i32 = arith.constant 0 : i32
    %c0_i32_0 = arith.constant 0 : i32
    %c0_i32_1 = arith.constant 0 : i32
    return %c0_i32, %c0_i32_0 : i32, i32
  }
  func.func @transform_5(%arg0: i32) -> (i32, i32) {
    %c0_i32 = arith.constant 0 : i32
    %c0_i32_0 = arith.constant 0 : i32
    %c0_i32_1 = arith.constant 0 : i32
    return %c0_i32, %c0_i32_0 : i32, i32
  }
  func.func @transform_6(%arg0: i32) -> (i32, i32) {
    %c0_i32 = arith.constant 0 : i32
    %c0_i32_0 = arith.constant 0 : i32
    %c0_i32_1 = arith.constant 0 : i32
    return %c0_i32, %c0_i32_0 : i32, i32
  }
  func.func @transform_7(%arg0: i32) -> (i32, i32) {
    %c0_i32 = arith.constant 0 : i32
    %c0_i32_0 = arith.constant 0 : i32
    %c0_i32_1 = arith.constant 0 : i32
    return %c0_i32, %c0_i32_0 : i32, i32
  }
  func.func @transform_8(%arg0: i32) -> (i32, i32) {
    %c0_i32 = arith.constant 0 : i32
    %c0_i32_0 = arith.constant 0 : i32
    %c0_i32_1 = arith.constant 0 : i32
    return %c0_i32, %c0_i32_0 : i32, i32
  }
  func.func @transform_9(%arg0: i32) -> (i32, i32) {
    %c0_i32 = arith.constant 0 : i32
    %c0_i32_0 = arith.constant 0 : i32
    return %arg0, %c0_i32 : i32, i32
  }
}

</mosaic_0001>

<llo_original>
// kernel: tpu_custom_call.1
$region0: #{tpu_custom_call.1}
  #allocation0 [shape = 'u32[]', space=smem, size = 0x4, offset = 0x4, fixed_abs, tag = 'smem constant byte address 0x4 - core index']
  #allocation1 [shape = 'u32[72,128]{1,0:T(1,128)}', space=vmem, size = 0x9000, scoped, tag = 'internal scratch']
  %s0 = inlined_call_operand.vmem [shape: f32[200,32], index: 0, kind: input, shape index: {}]
  %s1 = inlined_call_operand.vmem [shape: bf16[32,256], index: 1, kind: input, shape index: {}]
  %s2 = inlined_call_operand.vmem [shape: f32[1,256], index: 2, kind: input, shape index: {}]
  %s3 = inlined_call_operand.vmem [shape: bf16[256,128], index: 3, kind: input, shape index: {}]
  %s4 = inlined_call_operand.vmem [shape: f32[1,128], index: 4, kind: input, shape index: {}]
  %s5 = inlined_call_operand.vmem [shape: bf16[128,64], index: 5, kind: input, shape index: {}]
  %s6 = inlined_call_operand.vmem [shape: f32[1,64], index: 6, kind: input, shape index: {}]
  %s7 = inlined_call_operand.vmem [shape: bf16[64,128], index: 7, kind: input, shape index: {}]
  %s8 = inlined_call_operand.vmem [shape: f32[1,128], index: 8, kind: input, shape index: {}]
  %s9 = inlined_call_operand.hbm [shape: f32[200,128], index: 9, kind: output, shape index: {}]
  %s10 = sld [smem:[#allocation0]]
  $region46: #{tpu_custom_call.1} parent=0
    _
  %s12 = ssub.s32 1, %s10
  %s13 = scalar_select 0, %s12, %s10
  $region1: #{tpu_custom_call.1} parent=0
    #allocation2 [shape = 'u8[102400]{0}', space=vmem, size = 0x19000, scoped, tag = 'output window, operand 0, single buffered']
    #allocation3 [shape = 's32[1]{0}', space=sflag, size = 0x4, scoped, tag = 'scoped memory for tpu_custom_call.1']
    %14 = vsyncpa [#allocation3], 0
    // Predicated region
    $region2: #{tpu_custom_call.1} parent=1 // pred_check
      _
    $region3: #{tpu_custom_call.1} parent=1 // pred_check_branch
      %16 = sbr.rel (0) target = $region5
    $region4: #{tpu_custom_call.1} parent=1 // pred_region
      _
    $region5: #{tpu_custom_call.1} parent=1 // pred_fallthru
      _
    // Predicated region
    $region6: #{tpu_custom_call.1} parent=1 // pred_check
      _
    $region7: #{tpu_custom_call.1} parent=1 // pred_check_branch
      %18 = sbr.rel (0) target = $region9
    $region8: #{tpu_custom_call.1} parent=1 // pred_region
      _
    $region9: #{tpu_custom_call.1} parent=1 // pred_fallthru
      _
    // Predicated region
    $region10: #{tpu_custom_call.1} parent=1 // pred_check
      _
    $region11: #{tpu_custom_call.1} parent=1 // pred_check_branch
      %20 = sbr.rel (0) target = $region13
    $region12: #{tpu_custom_call.1} parent=1 // pred_region
      _
    $region13: #{tpu_custom_call.1} parent=1 // pred_fallthru
      _
    // Predicated region
    $region14: #{tpu_custom_call.1} parent=1 // pred_check
      _
    $region15: #{tpu_custom_call.1} parent=1 // pred_check_branch
      %22 = sbr.rel (0) target = $region17
    $region16: #{tpu_custom_call.1} parent=1 // pred_region
      _
    $region17: #{tpu_custom_call.1} parent=1 // pred_fallthru
      _
    // Predicated region
    $region18: #{tpu_custom_call.1} parent=1 // pred_check
      _
    $region19: #{tpu_custom_call.1} parent=1 // pred_check_branch
      %24 = sbr.rel (0) target = $region21
    $region20: #{tpu_custom_call.1} parent=1 // pred_region
      _
    $region21: #{tpu_custom_call.1} parent=1 // pred_fallthru
      _
    // Predicated region
    $region22: #{tpu_custom_call.1} parent=1 // pred_check
      _
    $region23: #{tpu_custom_call.1} parent=1 // pred_check_branch
      %26 = sbr.rel (0) target = $region25
    $region24: #{tpu_custom_call.1} parent=1 // pred_region
      _
    $region25: #{tpu_custom_call.1} parent=1 // pred_fallthru
      _
    // Predicated region
    $region26: #{tpu_custom_call.1} parent=1 // pred_check
      _
    $region27: #{tpu_custom_call.1} parent=1 // pred_check_branch
      %28 = sbr.rel (0) target = $region29
    $region28: #{tpu_custom_call.1} parent=1 // pred_region
      _
    $region29: #{tpu_custom_call.1} parent=1 // pred_fallthru
      _
    // Predicated region
    $region30: #{tpu_custom_call.1} parent=1 // pred_check
      _
    $region31: #{tpu_custom_call.1} parent=1 // pred_check_branch
      %30 = sbr.rel (0) target = $region33
    $region32: #{tpu_custom_call.1} parent=1 // pred_region
      _
    $region33: #{tpu_custom_call.1} parent=1 // pred_fallthru
      _
    // Predicated region
    $region34: #{tpu_custom_call.1} parent=1 // pred_check
      _
    $region35: #{tpu_custom_call.1} parent=1 // pred_check_branch
      %32 = sbr.rel (0) target = $region37
    $region36: #{tpu_custom_call.1} parent=1 // pred_region
      _
    $region37: #{tpu_custom_call.1} parent=1 // pred_fallthru
      _
    %v34 = vld [vmem:[%s0] sm:$0xff]
    %v35 = vld [vmem:[%s0 + $0x8] sm:$0xff]
    %v36 = vld [vmem:[%s0 + $0x10] sm:$0xff]
    %v37 = vld [vmem:[%s0 + $0x18] sm:$0xff]
    %v38 = vld [vmem:[%s0 + $0x20] sm:$0xff]
    %v39 = vld [vmem:[%s0 + $0x28] sm:$0xff]
    %v40 = vld [vmem:[%s0 + $0x30] sm:$0xff]
    %v41 = vld [vmem:[%s0 + $0x38] sm:$0xff]
    %v42 = vld [vmem:[%s0 + $0x40] sm:$0xff]
    %v43 = vld [vmem:[%s0 + $0x48] sm:$0xff]
    %v44 = vld [vmem:[%s0 + $0x50] sm:$0xff]
    %v45 = vld [vmem:[%s0 + $0x58] sm:$0xff]
    %v46 = vld [vmem:[%s0 + $0x60] sm:$0xff]
    %v47 = vld [vmem:[%s0 + $0x68] sm:$0xff]
    %v48 = vld [vmem:[%s0 + $0x70] sm:$0xff]
    %v49 = vld [vmem:[%s0 + $0x78] sm:$0xff]
    %v50 = vld [vmem:[%s0 + $0x80] sm:$0xff]
    %v51 = vld [vmem:[%s0 + $0x88] sm:$0xff]
    %v52 = vld [vmem:[%s0 + $0x90] sm:$0xff]
    %v53 = vld [vmem:[%s0 + $0x98] sm:$0xff]
    %v54 = vld [vmem:[%s0 + $0xa0] sm:$0xff]
    %v55 = vld [vmem:[%s0 + $0xa8] sm:$0xff]
    %v56 = vld [vmem:[%s0 + $0xb0] sm:$0xff]
    %v57 = vld [vmem:[%s0 + $0xb8] sm:$0xff]
    %v58 = vld [vmem:[%s0 + $0xc0] sm:$0xff]
    %v59 = vpack.c.bf16 %v35, %v34
    %v60 = vpack.c.bf16 %v37, %v36
    %v61 = vpack.c.bf16 %v39, %v38
    %v62 = vpack.c.bf16 %v41, %v40
    %v63 = vpack.c.bf16 %v43, %v42
    %v64 = vpack.c.bf16 %v45, %v44
    %v65 = vpack.c.bf16 %v47, %v46
    %v66 = vpack.c.bf16 %v49, %v48
    %v67 = vpack.c.bf16 %v51, %v50
    %v68 = vpack.c.bf16 %v53, %v52
    %v69 = vpack.c.bf16 %v55, %v54
    %v70 = vpack.c.bf16 %v57, %v56
    %v71 = vpack.c.bf16 %v58, %v58
    %v72 = vld [vmem:[%s1] sm:$0xff]
    %v73 = vld [vmem:[%s1 + $0x8] sm:$0xff]
    %v74 = vld [vmem:[%s1 + $0x10] sm:$0xff]
    %v75 = vld [vmem:[%s1 + $0x18] sm:$0xff]
    %v76 = vld [vmem:[%s2] sm:$0x3]
    %v78 = vperm.slane %v76, 0
    %v79 = vperm.slane %v76, 1
    %v86 = vunpack.c.l.b16 %v72
    %v87 = vunpack.c.h.b16 %v72
    %v88 = vunpack.c.l.b16 %v73
    %v89 = vunpack.c.h.b16 %v73
    %v90 = vunpack.c.l.b16 %v74
    %v91 = vunpack.c.h.b16 %v74
    %v92 = vunpack.c.l.b16 %v75
    %v93 = vunpack.c.h.b16 %v75
    %v94 = vpack.c.b16 %v88, %v86
    %v95 = vpack.c.b16 %v89, %v87
    %v96 = vpack.c.b16 %v92, %v90
    %v97 = vpack.c.b16 %v93, %v91
    %vm102 = vcmask 261120
    %v104 = vsel %vm102, %v59, 0
    %v107 = vsel %vm102, %v60, 0
    %v110 = vsel %vm102, %v61, 0
    %v113 = vsel %vm102, %v62, 0
    %v116 = vsel %vm102, %v63, 0
    %v119 = vsel %vm102, %v64, 0
    %v122 = vsel %vm102, %v65, 0
    %v125 = vsel %vm102, %v66, 0
    %v128 = vsel %vm102, %v67, 0
    %v131 = vsel %vm102, %v68, 0
    %v134 = vsel %vm102, %v69, 0
    %v137 = vsel %vm102, %v70, 0
    %v140 = vsel %vm102, %v71, 0
    %142 = vmatpush.bf16.msra.mxu0 0
    %143 = vmatpush.bf16.msra.mxu0 0
    %144 = vmatpush.bf16.msra.mxu0 0
    %145 = vmatpush.bf16.msra.mxu0 0
    %146 = vmatpush.bf16.msra.mxu0 0
    %147 = vmatpush.bf16.msra.mxu0 0
    %148 = vmatpush.bf16.msra.mxu0 %v96
    %149 = vmatpush.bf16.msra.mxu0 %v94
    %150 = vmatmul.bf16.gmra.mxu0 %v104
    %v151 = vpop.f32.mrf.mxu0
    %v152 = vadd.f32 %v78, %v151
    %v153 = vpop.f32.mrf.mxu0
    %v154 = vadd.f32 %v78, %v153
    %155 = vmatmul.bf16.gmra.mxu0 %v107
    %v156 = vpop.f32.mrf.mxu0
    %v157 = vadd.f32 %v78, %v156
    %v158 = vpop.f32.mrf.mxu0
    %v159 = vadd.f32 %v78, %v158
    %160 = vmatmul.bf16.gmra.mxu0 %v110
    %v161 = vpop.f32.mrf.mxu0
    %v162 = vadd.f32 %v78, %v161
    %v163 = vpop.f32.mrf.mxu0
    %v164 = vadd.f32 %v78, %v163
    %165 = vmatmul.bf16.gmra.mxu0 %v113
    %v166 = vpop.f32.mrf.mxu0
    %v167 = vadd.f32 %v78, %v166
    %v168 = vpop.f32.mrf.mxu0
    %v169 = vadd.f32 %v78, %v168
    %170 = vmatmul.bf16.gmra.mxu0 %v116
    %v171 = vpop.f32.mrf.mxu0
    %v172 = vadd.f32 %v78, %v171
    %v173 = vpop.f32.mrf.mxu0
    %v174 = vadd.f32 %v78, %v173
    %175 = vmatmul.bf16.gmra.mxu0 %v119
    %v176 = vpop.f32.mrf.mxu0
    %v177 = vadd.f32 %v78, %v176
    %v178 = vpop.f32.mrf.mxu0
    %v179 = vadd.f32 %v78, %v178
    %180 = vmatmul.bf16.gmra.mxu0 %v122
    %v181 = vpop.f32.mrf.mxu0
    %v182 = vadd.f32 %v78, %v181
    %v183 = vpop.f32.mrf.mxu0
    %v184 = vadd.f32 %v78, %v183
    %185 = vmatmul.bf16.gmra.mxu0 %v125
    %v186 = vpop.f32.mrf.mxu0
    %v187 = vadd.f32 %v78, %v186
    %v188 = vpop.f32.mrf.mxu0
    %v189 = vadd.f32 %v78, %v188
    %190 = vmatmul.bf16.gmra.mxu0 %v128
    %v191 = vpop.f32.mrf.mxu0
    %v192 = vadd.f32 %v78, %v191
    %v193 = vpop.f32.mrf.mxu0
    %v194 = vadd.f32 %v78, %v193
    %195 = vmatmul.bf16.gmra.mxu0 %v131
    %v196 = vpop.f32.mrf.mxu0
    %v197 = vadd.f32 %v78, %v196
    %v198 = vpop.f32.mrf.mxu0
    %v199 = vadd.f32 %v78, %v198
    %200 = vmatmul.bf16.gmra.mxu0 %v134
    %v201 = vpop.f32.mrf.mxu0
    %v202 = vadd.f32 %v78, %v201
    %v203 = vpop.f32.mrf.mxu0
    %v204 = vadd.f32 %v78, %v203
    %205 = vmatmul.bf16.gmra.mxu0 %v137
    %v206 = vpop.f32.mrf.mxu0
    %v207 = vadd.f32 %v78, %v206
    %v208 = vpop.f32.mrf.mxu0
    %v209 = vadd.f32 %v78, %v208
    %210 = vmatmul.bf16.gmra.mxu0 %v140
    %v211 = vpop.f32.mrf.mxu0
    %v212 = vadd.f32 %v78, %v211
    %v213 = vpop.f32.mrf.mxu0
    %214 = vdwg.mxu0
    %215 = vmatpush.bf16.msra.mxu0 0
    %216 = vmatpush.bf16.msra.mxu0 0
    %217 = vmatpush.bf16.msra.mxu0 0
    %218 = vmatpush.bf16.msra.mxu0 0
    %219 = vmatpush.bf16.msra.mxu0 0
    %220 = vmatpush.bf16.msra.mxu0 0
    %221 = vmatpush.bf16.msra.mxu0 %v97
    %222 = vmatpush.bf16.msra.mxu0 %v95
    %223 = vmatmul.bf16.gmra.mxu0 %v104
    %v224 = vpop.f32.mrf.mxu0
    %v225 = vadd.f32 %v79, %v224
    %v226 = vpop.f32.mrf.mxu0
    %v227 = vadd.f32 %v79, %v226
    %228 = vmatmul.bf16.gmra.mxu0 %v107
    %v229 = vpop.f32.mrf.mxu0
    %v230 = vadd.f32 %v79, %v229
    %v231 = vpop.f32.mrf.mxu0
    %v232 = vadd.f32 %v79, %v231
    %233 = vmatmul.bf16.gmra.mxu0 %v110
    %v234 = vpop.f32.mrf.mxu0
    %v235 = vadd.f32 %v79, %v234
    %v236 = vpop.f32.mrf.mxu0
    %v237 = vadd.f32 %v79, %v236
    %238 = vmatmul.bf16.gmra.mxu0 %v113
    %v239 = vpop.f32.mrf.mxu0
    %v240 = vadd.f32 %v79, %v239
    %v241 = vpop.f32.mrf.mxu0
    %v242 = vadd.f32 %v79, %v241
    %243 = vmatmul.bf16.gmra.mxu0 %v116
    %v244 = vpop.f32.mrf.mxu0
    %v245 = vadd.f32 %v79, %v244
    %v246 = vpop.f32.mrf.mxu0
    %v247 = vadd.f32 %v79, %v246
    %248 = vmatmul.bf16.gmra.mxu0 %v119
    %v249 = vpop.f32.mrf.mxu0
    %v250 = vadd.f32 %v79, %v249
    %v251 = vpop.f32.mrf.mxu0
    %v252 = vadd.f32 %v79, %v251
    %253 = vmatmul.bf16.gmra.mxu0 %v122
    %v254 = vpop.f32.mrf.mxu0
    %v255 = vadd.f32 %v79, %v254
    %v256 = vpop.f32.mrf.mxu0
    %v257 = vadd.f32 %v79, %v256
    %258 = vmatmul.bf16.gmra.mxu0 %v125
    %v259 = vpop.f32.mrf.mxu0
    %v260 = vadd.f32 %v79, %v259
    %v261 = vpop.f32.mrf.mxu0
    %v262 = vadd.f32 %v79, %v261
    %263 = vmatmul.bf16.gmra.mxu0 %v128
    %v264 = vpop.f32.mrf.mxu0
    %v265 = vadd.f32 %v79, %v264
    %v266 = vpop.f32.mrf.mxu0
    %v267 = vadd.f32 %v79, %v266
    %268 = vmatmul.bf16.gmra.mxu0 %v131
    %v269 = vpop.f32.mrf.mxu0
    %v270 = vadd.f32 %v79, %v269
    %v271 = vpop.f32.mrf.mxu0
    %v272 = vadd.f32 %v79, %v271
    %273 = vmatmul.bf16.gmra.mxu0 %v134
    %v274 = vpop.f32.mrf.mxu0
    %v275 = vadd.f32 %v79, %v274
    %v276 = vpop.f32.mrf.mxu0
    %v277 = vadd.f32 %v79, %v276
    %278 = vmatmul.bf16.gmra.mxu0 %v137
    %v279 = vpop.f32.mrf.mxu0
    %v280 = vadd.f32 %v79, %v279
    %v281 = vpop.f32.mrf.mxu0
    %v282 = vadd.f32 %v79, %v281
    %283 = vmatmul.bf16.gmra.mxu0 %v140
    %v284 = vpop.f32.mrf.mxu0
    %v285 = vadd.f32 %v79, %v284
    %v286 = vpop.f32.mrf.mxu0
    %287 = vdwg.mxu0
    %v288 = vmax.f32 %v152, 0.0
    %v289 = vmax.f32 %v225, 0.0
    %v290 = vmax.f32 %v154, 0.0
    %v291 = vmax.f32 %v227, 0.0
    %v292 = vmax.f32 %v157, 0.0
    %v293 = vmax.f32 %v230, 0.0
    %v294 = vmax.f32 %v159, 0.0
    %v295 = vmax.f32 %v232, 0.0
    %v296 = vmax.f32 %v162, 0.0
    %v297 = vmax.f32 %v235, 0.0
    %v298 = vmax.f32 %v164, 0.0
    %v299 = vmax.f32 %v237, 0.0
    %v300 = vmax.f32 %v167, 0.0
    %v301 = vmax.f32 %v240, 0.0
    %v302 = vmax.f32 %v169, 0.0
    %v303 = vmax.f32 %v242, 0.0
    %v304 = vmax.f32 %v172, 0.0
    %v305 = vmax.f32 %v245, 0.0
    %v306 = vmax.f32 %v174, 0.0
    %v307 = vmax.f32 %v247, 0.0
    %v308 = vmax.f32 %v177, 0.0
    %v309 = vmax.f32 %v250, 0.0
    %v310 = vmax.f32 %v179, 0.0
    %v311 = vmax.f32 %v252, 0.0
    %v312 = vmax.f32 %v182, 0.0
    %v313 = vmax.f32 %v255, 0.0
    %v314 = vmax.f32 %v184, 0.0
    %v315 = vmax.f32 %v257, 0.0
    %v316 = vmax.f32 %v187, 0.0
    %v317 = vmax.f32 %v260, 0.0
    %v318 = vmax.f32 %v189, 0.0
    %v319 = vmax.f32 %v262, 0.0
    %v320 = vmax.f32 %v192, 0.0
    %v321 = vmax.f32 %v265, 0.0
    %v322 = vmax.f32 %v194, 0.0
    %v323 = vmax.f32 %v267, 0.0
    %v324 = vmax.f32 %v197, 0.0
    %v325 = vmax.f32 %v270, 0.0
    %v326 = vmax.f32 %v199, 0.0
    %v327 = vmax.f32 %v272, 0.0
    %v328 = vmax.f32 %v202, 0.0
    %v329 = vmax.f32 %v275, 0.0
    %v330 = vmax.f32 %v204, 0.0
    %v331 = vmax.f32 %v277, 0.0
    %v332 = vmax.f32 %v207, 0.0
    %v333 = vmax.f32 %v280, 0.0
    %v334 = vmax.f32 %v209, 0.0
    %v335 = vmax.f32 %v282, 0.0
    %v336 = vmax.f32 %v212, 0.0
    %v337 = vmax.f32 %v285, 0.0
    %v338 = vpack.c.bf16 %v290, %v288
    %v339 = vpack.c.bf16 %v291, %v289
    %v340 = vpack.c.bf16 %v294, %v292
    %v341 = vpack.c.bf16 %v295, %v293
    %v342 = vpack.c.bf16 %v298, %v296
    %v343 = vpack.c.bf16 %v299, %v297
    %v344 = vpack.c.bf16 %v302, %v300
    %v345 = vpack.c.bf16 %v303, %v301
    %v346 = vpack.c.bf16 %v306, %v304
    %v347 = vpack.c.bf16 %v307, %v305
    %v348 = vpack.c.bf16 %v310, %v308
    %v349 = vpack.c.bf16 %v311, %v309
    %v350 = vpack.c.bf16 %v314, %v312
    %v351 = vpack.c.bf16 %v315, %v313
    %v352 = vpack.c.bf16 %v318, %v316
    %v353 = vpack.c.bf16 %v319, %v317
    %v354 = vpack.c.bf16 %v322, %v320
    %v355 = vpack.c.bf16 %v323, %v321
    %v356 = vpack.c.bf16 %v326, %v324
    %v357 = vpack.c.bf16 %v327, %v325
    %v358 = vpack.c.bf16 %v330, %v328
    %v359 = vpack.c.bf16 %v331, %v329
    %v360 = vpack.c.bf16 %v334, %v332
    %v361 = vpack.c.bf16 %v335, %v333
    %v362 = vpack.c.bf16 %v336, %v336
    %v363 = vpack.c.bf16 %v337, %v337
    %v364 = vld [vmem:[%s3] sm:$0xf]
    %v365 = vld [vmem:[%s3 + $0x4] sm:$0xf]
    %v366 = vld [vmem:[%s3 + $0x8] sm:$0xf]
    %v367 = vld [vmem:[%s3 + $0xc] sm:$0xf]
    %v368 = vld [vmem:[%s3 + $0x10] sm:$0xf]
    %v369 = vld [vmem:[%s3 + $0x14] sm:$0xf]
    %v370 = vld [vmem:[%s3 + $0x18] sm:$0xf]
    %v371 = vld [vmem:[%s3 + $0x1c] sm:$0xf]
    %v372 = vld [vmem:[%s3 + $0x20] sm:$0xf]
    %v373 = vld [vmem:[%s3 + $0x24] sm:$0xf]
    %v374 = vld [vmem:[%s3 + $0x28] sm:$0xf]
    %v375 = vld [vmem:[%s3 + $0x2c] sm:$0xf]
    %v376 = vld [vmem:[%s3 + $0x30] sm:$0xf]
    %v377 = vld [vmem:[%s3 + $0x34] sm:$0xf]
    %v378 = vld [vmem:[%s3 + $0x38] sm:$0xf]
    %v379 = vld [vmem:[%s3 + $0x3c] sm:$0xf]
    %v380 = vld [vmem:[%s3 + $0x40] sm:$0xf]
    %v381 = vld [vmem:[%s3 + $0x44] sm:$0xf]
    %v382 = vld [vmem:[%s3 + $0x48] sm:$0xf]
    %v383 = vld [vmem:[%s3 + $0x4c] sm:$0xf]
    %v384 = vld [vmem:[%s3 + $0x50] sm:$0xf]
    %v385 = vld [vmem:[%s3 + $0x54] sm:$0xf]
    %v386 = vld [vmem:[%s3 + $0x58] sm:$0xf]
    %v387 = vld [vmem:[%s3 + $0x5c] sm:$0xf]
    %v388 = vld [vmem:[%s3 + $0x60] sm:$0xf]
    %v389 = vld [vmem:[%s3 + $0x64] sm:$0xf]
    %v390 = vld [vmem:[%s3 + $0x68] sm:$0xf]
    %v391 = vld [vmem:[%s3 + $0x6c] sm:$0xf]
    %v392 = vld [vmem:[%s3 + $0x70] sm:$0xf]
    %v393 = vld [vmem:[%s3 + $0x74] sm:$0xf]
    %v394 = vld [vmem:[%s3 + $0x78] sm:$0xf]
    %v395 = vld [vmem:[%s3 + $0x7c] sm:$0xf]
    %v396 = vld [vmem:[%s4] sm:$0x1]
    %v398 = vperm.slane %v396, 0
    %v432 = vunpack.c.l.b16 %v364
    %v433 = vunpack.c.l.b16 %v365
    %v434 = vunpack.c.l.b16 %v366
    %v435 = vunpack.c.l.b16 %v367
    %v436 = vunpack.c.l.b16 %v368
    %v437 = vunpack.c.l.b16 %v369
    %v438 = vunpack.c.l.b16 %v370
    %v439 = vunpack.c.l.b16 %v371
    %v440 = vunpack.c.l.b16 %v372
    %v441 = vunpack.c.l.b16 %v373
    %v442 = vunpack.c.l.b16 %v374
    %v443 = vunpack.c.l.b16 %v375
    %v444 = vunpack.c.l.b16 %v376
    %v445 = vunpack.c.l.b16 %v377
    %v446 = vunpack.c.l.b16 %v378
    %v447 = vunpack.c.l.b16 %v379
    %v448 = vunpack.c.l.b16 %v380
    %v449 = vunpack.c.l.b16 %v381
    %v450 = vunpack.c.l.b16 %v382
    %v451 = vunpack.c.l.b16 %v383
    %v452 = vunpack.c.l.b16 %v384
    %v453 = vunpack.c.l.b16 %v385
    %v454 = vunpack.c.l.b16 %v386
    %v455 = vunpack.c.l.b16 %v387
    %v456 = vunpack.c.l.b16 %v388
    %v457 = vunpack.c.l.b16 %v389
    %v458 = vunpack.c.l.b16 %v390
    %v459 = vunpack.c.l.b16 %v391
    %v460 = vunpack.c.l.b16 %v392
    %v461 = vunpack.c.l.b16 %v393
    %v462 = vunpack.c.l.b16 %v394
    %v463 = vunpack.c.l.b16 %v395
    %v464 = vpack.c.b16 %v433, %v432
    %v465 = vpack.c.b16 %v435, %v434
    %v466 = vpack.c.b16 %v437, %v436
    %v467 = vpack.c.b16 %v439, %v438
    %v468 = vpack.c.b16 %v441, %v440
    %v469 = vpack.c.b16 %v443, %v442
    %v470 = vpack.c.b16 %v445, %v444
    %v471 = vpack.c.b16 %v447, %v446
    %v472 = vpack.c.b16 %v449, %v448
    %v473 = vpack.c.b16 %v451, %v450
    %v474 = vpack.c.b16 %v453, %v452
    %v475 = vpack.c.b16 %v455, %v454
    %v476 = vpack.c.b16 %v457, %v456
    %v477 = vpack.c.b16 %v459, %v458
    %v478 = vpack.c.b16 %v461, %v460
    %v479 = vpack.c.b16 %v463, %v462
    %496 = vmatpush.bf16.msra.mxu0 %v471
    %497 = vmatpush.bf16.msra.mxu0 %v470
    %498 = vmatpush.bf16.msra.mxu0 %v469
    %499 = vmatpush.bf16.msra.mxu0 %v468
    %500 = vmatpush.bf16.msra.mxu0 %v467
    %501 = vmatpush.bf16.msra.mxu0 %v466
    %502 = vmatpush.bf16.msra.mxu0 %v465
    %503 = vmatpush.bf16.msra.mxu0 %v464
    %504 = vmatmul.bf16.gmra.mxu0 %v338
    %v505 = vpop.f32.mrf.mxu0
    %v506 = vadd.f32 %v398, %v505
    %v507 = vpop.f32.mrf.mxu0
    %v508 = vadd.f32 %v398, %v507
    %509 = vmatmul.bf16.gmra.mxu0 %v340
    %v510 = vpop.f32.mrf.mxu0
    %v511 = vadd.f32 %v398, %v510
    %v512 = vpop.f32.mrf.mxu0
    %v513 = vadd.f32 %v398, %v512
    %514 = vmatmul.bf16.gmra.mxu0 %v342
    %v515 = vpop.f32.mrf.mxu0
    %v516 = vadd.f32 %v398, %v515
    %v517 = vpop.f32.mrf.mxu0
    %v518 = vadd.f32 %v398, %v517
    %519 = vmatmul.bf16.gmra.mxu0 %v344
    %v520 = vpop.f32.mrf.mxu0
    %v521 = vadd.f32 %v398, %v520
    %v522 = vpop.f32.mrf.mxu0
    %v523 = vadd.f32 %v398, %v522
    %524 = vmatmul.bf16.gmra.mxu0 %v346
    %v525 = vpop.f32.mrf.mxu0
    %v526 = vadd.f32 %v398, %v525
    %v527 = vpop.f32.mrf.mxu0
    %v528 = vadd.f32 %v398, %v527
    %529 = vmatmul.bf16.gmra.mxu0 %v348
    %v530 = vpop.f32.mrf.mxu0
    %v531 = vadd.f32 %v398, %v530
    %v532 = vpop.f32.mrf.mxu0
    %v533 = vadd.f32 %v398, %v532
    %534 = vmatmul.bf16.gmra.mxu0 %v350
    %v535 = vpop.f32.mrf.mxu0
    %v536 = vadd.f32 %v398, %v535
    %v537 = vpop.f32.mrf.mxu0
    %v538 = vadd.f32 %v398, %v537
    %539 = vmatmul.bf16.gmra.mxu0 %v352
    %v540 = vpop.f32.mrf.mxu0
    %v541 = vadd.f32 %v398, %v540
    %v542 = vpop.f32.mrf.mxu0
    %v543 = vadd.f32 %v398, %v542
    %544 = vmatmul.bf16.gmra.mxu0 %v354
    %v545 = vpop.f32.mrf.mxu0
    %v546 = vadd.f32 %v398, %v545
    %v547 = vpop.f32.mrf.mxu0
    %v548 = vadd.f32 %v398, %v547
    %549 = vmatmul.bf16.gmra.mxu0 %v356
    %v550 = vpop.f32.mrf.mxu0
    %v551 = vadd.f32 %v398, %v550
    %v552 = vpop.f32.mrf.mxu0
    %v553 = vadd.f32 %v398, %v552
    %554 = vmatmul.bf16.gmra.mxu0 %v358
    %v555 = vpop.f32.mrf.mxu0
    %v556 = vadd.f32 %v398, %v555
    %v557 = vpop.f32.mrf.mxu0
    %v558 = vadd.f32 %v398, %v557
    %559 = vmatmul.bf16.gmra.mxu0 %v360
    %v560 = vpop.f32.mrf.mxu0
    %v561 = vadd.f32 %v398, %v560
    %v562 = vpop.f32.mrf.mxu0
    %v563 = vadd.f32 %v398, %v562
    %564 = vmatmul.bf16.gmra.mxu0 %v362
    %v565 = vpop.f32.mrf.mxu0
    %v566 = vadd.f32 %v398, %v565
    %v567 = vpop.f32.mrf.mxu0
    %568 = vdwg.mxu0
    %569 = vmatpush.bf16.msra.mxu0 %v479
    %570 = vmatpush.bf16.msra.mxu0 %v478
    %571 = vmatpush.bf16.msra.mxu0 %v477
    %572 = vmatpush.bf16.msra.mxu0 %v476
    %573 = vmatpush.bf16.msra.mxu0 %v475
    %574 = vmatpush.bf16.msra.mxu0 %v474
    %575 = vmatpush.bf16.msra.mxu0 %v473
    %576 = vmatpush.bf16.msra.mxu0 %v472
    %577 = vmatmul.bf16.gmra.mxu0 %v339
    %v578 = vpop.f32.mrf.mxu0
    %v579 = vadd.f32 %v506, %v578
    %v580 = vpop.f32.mrf.mxu0
    %v581 = vadd.f32 %v508, %v580
    %582 = vmatmul.bf16.gmra.mxu0 %v341
    %v583 = vpop.f32.mrf.mxu0
    %v584 = vadd.f32 %v511, %v583
    %v585 = vpop.f32.mrf.mxu0
    %v586 = vadd.f32 %v513, %v585
    %587 = vmatmul.bf16.gmra.mxu0 %v343
    %v588 = vpop.f32.mrf.mxu0
    %v589 = vadd.f32 %v516, %v588
    %v590 = vpop.f32.mrf.mxu0
    %v591 = vadd.f32 %v518, %v590
    %592 = vmatmul.bf16.gmra.mxu0 %v345
    %v593 = vpop.f32.mrf.mxu0
    %v594 = vadd.f32 %v521, %v593
    %v595 = vpop.f32.mrf.mxu0
    %v596 = vadd.f32 %v523, %v595
    %597 = vmatmul.bf16.gmra.mxu0 %v347
    %v598 = vpop.f32.mrf.mxu0
    %v599 = vadd.f32 %v526, %v598
    %v600 = vpop.f32.mrf.mxu0
    %v601 = vadd.f32 %v528, %v600
    %602 = vmatmul.bf16.gmra.mxu0 %v349
    %v603 = vpop.f32.mrf.mxu0
    %v604 = vadd.f32 %v531, %v603
    %v605 = vpop.f32.mrf.mxu0
    %v606 = vadd.f32 %v533, %v605
    %607 = vmatmul.bf16.gmra.mxu0 %v351
    %v608 = vpop.f32.mrf.mxu0
    %v609 = vadd.f32 %v536, %v608
    %v610 = vpop.f32.mrf.mxu0
    %v611 = vadd.f32 %v538, %v610
    %612 = vmatmul.bf16.gmra.mxu0 %v353
    %v613 = vpop.f32.mrf.mxu0
    %v614 = vadd.f32 %v541, %v613
    %v615 = vpop.f32.mrf.mxu0
    %v616 = vadd.f32 %v543, %v615
    %617 = vmatmul.bf16.gmra.mxu0 %v355
    %v618 = vpop.f32.mrf.mxu0
    %v619 = vadd.f32 %v546, %v618
    %v620 = vpop.f32.mrf.mxu0
    %v621 = vadd.f32 %v548, %v620
    %622 = vmatmul.bf16.gmra.mxu0 %v357
    %v623 = vpop.f32.mrf.mxu0
    %v624 = vadd.f32 %v551, %v623
    %v625 = vpop.f32.mrf.mxu0
    %v626 = vadd.f32 %v553, %v625
    %627 = vmatmul.bf16.gmra.mxu0 %v359
    %v628 = vpop.f32.mrf.mxu0
    %v629 = vadd.f32 %v556, %v628
    %v630 = vpop.f32.mrf.mxu0
    %v631 = vadd.f32 %v558, %v630
    %632 = vmatmul.bf16.gmra.mxu0 %v361
    %v633 = vpop.f32.mrf.mxu0
    %v634 = vadd.f32 %v561, %v633
    %v635 = vpop.f32.mrf.mxu0
    %v636 = vadd.f32 %v563, %v635
    %637 = vmatmul.bf16.gmra.mxu0 %v363
    %v638 = vpop.f32.mrf.mxu0
    %v639 = vadd.f32 %v566, %v638
    %v640 = vpop.f32.mrf.mxu0
    %641 = vdwg.mxu0
    %v642 = vmax.f32 %v579, 0.0
    %v643 = vmax.f32 %v581, 0.0
    %v644 = vmax.f32 %v584, 0.0
    %v645 = vmax.f32 %v586, 0.0
    %v646 = vmax.f32 %v589, 0.0
    %v647 = vmax.f32 %v591, 0.0
    %v648 = vmax.f32 %v594, 0.0
    %v649 = vmax.f32 %v596, 0.0
    %v650 = vmax.f32 %v599, 0.0
    %v651 = vmax.f32 %v601, 0.0
    %v652 = vmax.f32 %v604, 0.0
    %v653 = vmax.f32 %v606, 0.0
    %v654 = vmax.f32 %v609, 0.0
    %v655 = vmax.f32 %v611, 0.0
    %v656 = vmax.f32 %v614, 0.0
    %v657 = vmax.f32 %v616, 0.0
    %v658 = vmax.f32 %v619, 0.0
    %v659 = vmax.f32 %v621, 0.0
    %v660 = vmax.f32 %v624, 0.0
    %v661 = vmax.f32 %v626, 0.0
    %v662 = vmax.f32 %v629, 0.0
    %v663 = vmax.f32 %v631, 0.0
    %v664 = vmax.f32 %v634, 0.0
    %v665 = vmax.f32 %v636, 0.0
    %v666 = vmax.f32 %v639, 0.0
    %v667 = vpack.c.bf16 %v643, %v642
    %v668 = vpack.c.bf16 %v645, %v644
    %v669 = vpack.c.bf16 %v647, %v646
    %v670 = vpack.c.bf16 %v649, %v648
    %v671 = vpack.c.bf16 %v651, %v650
    %v672 = vpack.c.bf16 %v653, %v652
    %v673 = vpack.c.bf16 %v655, %v654
    %v674 = vpack.c.bf16 %v657, %v656
    %v675 = vpack.c.bf16 %v659, %v658
    %v676 = vpack.c.bf16 %v661, %v660
    %v677 = vpack.c.bf16 %v663, %v662
    %v678 = vpack.c.bf16 %v665, %v664
    %v679 = vpack.c.bf16 %v666, %v666
    %v680 = vld [vmem:[%s5] sm:$0xf]
    %v681 = vld [vmem:[%s5 + $0x4] sm:$0xf]
    %v682 = vld [vmem:[%s5 + $0x8] sm:$0xf]
    %v683 = vld [vmem:[%s5 + $0xc] sm:$0xf]
    %v684 = vld [vmem:[%s5 + $0x10] sm:$0xf]
    %v685 = vld [vmem:[%s5 + $0x14] sm:$0xf]
    %v686 = vld [vmem:[%s5 + $0x18] sm:$0xf]
    %v687 = vld [vmem:[%s5 + $0x1c] sm:$0xf]
    %v688 = vld [vmem:[%s5 + $0x20] sm:$0xf]
    %v689 = vld [vmem:[%s5 + $0x24] sm:$0xf]
    %v690 = vld [vmem:[%s5 + $0x28] sm:$0xf]
    %v691 = vld [vmem:[%s5 + $0x2c] sm:$0xf]
    %v692 = vld [vmem:[%s5 + $0x30] sm:$0xf]
    %v693 = vld [vmem:[%s5 + $0x34] sm:$0xf]
    %v694 = vld [vmem:[%s5 + $0x38] sm:$0xf]
    %v695 = vld [vmem:[%s5 + $0x3c] sm:$0xf]
    %v696 = vld [vmem:[%s6] sm:$0x1]
    %v698 = vperm.slane %v696, 0
    %v716 = vunpack.c.l.b16 %v680
    %v717 = vunpack.c.l.b16 %v681
    %v718 = vunpack.c.l.b16 %v682
    %v719 = vunpack.c.l.b16 %v683
    %v720 = vunpack.c.l.b16 %v684
    %v721 = vunpack.c.l.b16 %v685
    %v722 = vunpack.c.l.b16 %v686
    %v723 = vunpack.c.l.b16 %v687
    %v724 = vunpack.c.l.b16 %v688
    %v725 = vunpack.c.l.b16 %v689
    %v726 = vunpack.c.l.b16 %v690
    %v727 = vunpack.c.l.b16 %v691
    %v728 = vunpack.c.l.b16 %v692
    %v729 = vunpack.c.l.b16 %v693
    %v730 = vunpack.c.l.b16 %v694
    %v731 = vunpack.c.l.b16 %v695
    %v732 = vpack.c.b16 %v717, %v716
    %v733 = vpack.c.b16 %v719, %v718
    %v734 = vpack.c.b16 %v721, %v720
    %v735 = vpack.c.b16 %v723, %v722
    %v736 = vpack.c.b16 %v725, %v724
    %v737 = vpack.c.b16 %v727, %v726
    %v738 = vpack.c.b16 %v729, %v728
    %v739 = vpack.c.b16 %v731, %v730
    %748 = vmatpush.bf16.msra.mxu0 %v739
    %749 = vmatpush.bf16.msra.mxu0 %v738
    %750 = vmatpush.bf16.msra.mxu0 %v737
    %751 = vmatpush.bf16.msra.mxu0 %v736
    %752 = vmatpush.bf16.msra.mxu0 %v735
    %753 = vmatpush.bf16.msra.mxu0 %v734
    %754 = vmatpush.bf16.msra.mxu0 %v733
    %755 = vmatpush.bf16.msra.mxu0 %v732
    %756 = vmatmul.bf16.gmra.mxu0 %v667
    %v757 = vpop.f32.mrf.mxu0
    %v758 = vadd.f32 %v698, %v757
    %v759 = vpop.f32.mrf.mxu0
    %v760 = vadd.f32 %v698, %v759
    %761 = vmatmul.bf16.gmra.mxu0 %v668
    %v762 = vpop.f32.mrf.mxu0
    %v763 = vadd.f32 %v698, %v762
    %v764 = vpop.f32.mrf.mxu0
    %v765 = vadd.f32 %v698, %v764
    %766 = vmatmul.bf16.gmra.mxu0 %v669
    %v767 = vpop.f32.mrf.mxu0
    %v768 = vadd.f32 %v698, %v767
    %v769 = vpop.f32.mrf.mxu0
    %v770 = vadd.f32 %v698, %v769
    %771 = vmatmul.bf16.gmra.mxu0 %v670
    %v772 = vpop.f32.mrf.mxu0
    %v773 = vadd.f32 %v698, %v772
    %v774 = vpop.f32.mrf.mxu0
    %v775 = vadd.f32 %v698, %v774
    %776 = vmatmul.bf16.gmra.mxu0 %v671
    %v777 = vpop.f32.mrf.mxu0
    %v778 = vadd.f32 %v698, %v777
    %v779 = vpop.f32.mrf.mxu0
    %v780 = vadd.f32 %v698, %v779
    %781 = vmatmul.bf16.gmra.mxu0 %v672
    %v782 = vpop.f32.mrf.mxu0
    %v783 = vadd.f32 %v698, %v782
    %v784 = vpop.f32.mrf.mxu0
    %v785 = vadd.f32 %v698, %v784
    %786 = vmatmul.bf16.gmra.mxu0 %v673
    %v787 = vpop.f32.mrf.mxu0
    %v788 = vadd.f32 %v698, %v787
    %v789 = vpop.f32.mrf.mxu0
    %v790 = vadd.f32 %v698, %v789
    %791 = vmatmul.bf16.gmra.mxu0 %v674
    %v792 = vpop.f32.mrf.mxu0
    %v793 = vadd.f32 %v698, %v792
    %v794 = vpop.f32.mrf.mxu0
    %v795 = vadd.f32 %v698, %v794
    %796 = vmatmul.bf16.gmra.mxu0 %v675
    %v797 = vpop.f32.mrf.mxu0
    %v798 = vadd.f32 %v698, %v797
    %v799 = vpop.f32.mrf.mxu0
    %v800 = vadd.f32 %v698, %v799
    %801 = vmatmul.bf16.gmra.mxu0 %v676
    %v802 = vpop.f32.mrf.mxu0
    %v803 = vadd.f32 %v698, %v802
    %v804 = vpop.f32.mrf.mxu0
    %v805 = vadd.f32 %v698, %v804
    %806 = vmatmul.bf16.gmra.mxu0 %v677
    %v807 = vpop.f32.mrf.mxu0
    %v808 = vadd.f32 %v698, %v807
    %v809 = vpop.f32.mrf.mxu0
    %v810 = vadd.f32 %v698, %v809
    %811 = vmatmul.bf16.gmra.mxu0 %v678
    %v812 = vpop.f32.mrf.mxu0
    %v813 = vadd.f32 %v698, %v812
    %v814 = vpop.f32.mrf.mxu0
    %v815 = vadd.f32 %v698, %v814
    %816 = vmatmul.bf16.gmra.mxu0 %v679
    %v817 = vpop.f32.mrf.mxu0
    %v818 = vadd.f32 %v698, %v817
    %v819 = vpop.f32.mrf.mxu0
    %820 = vdwg.mxu0
    %v821 = vmax.f32 %v758, 0.0
    %v822 = vmax.f32 %v760, 0.0
    %v823 = vmax.f32 %v763, 0.0
    %v824 = vmax.f32 %v765, 0.0
    %v825 = vmax.f32 %v768, 0.0
    %v826 = vmax.f32 %v770, 0.0
    %v827 = vmax.f32 %v773, 0.0
    %v828 = vmax.f32 %v775, 0.0
    %v829 = vmax.f32 %v778, 0.0
    %v830 = vmax.f32 %v780, 0.0
    %v831 = vmax.f32 %v783, 0.0
    %v832 = vmax.f32 %v785, 0.0
    %v833 = vmax.f32 %v788, 0.0
    %v834 = vmax.f32 %v790, 0.0
    %v835 = vmax.f32 %v793, 0.0
    %v836 = vmax.f32 %v795, 0.0
    %v837 = vmax.f32 %v798, 0.0
    %v838 = vmax.f32 %v800, 0.0
    %v839 = vmax.f32 %v803, 0.0
    %v840 = vmax.f32 %v805, 0.0
    %v841 = vmax.f32 %v808, 0.0
    %v842 = vmax.f32 %v810, 0.0
    %v843 = vmax.f32 %v813, 0.0
    %v844 = vmax.f32 %v815, 0.0
    %v845 = vmax.f32 %v818, 0.0
    %v846 = vpack.c.bf16 %v822, %v821
    %v847 = vpack.c.bf16 %v824, %v823
    %v848 = vpack.c.bf16 %v826, %v825
    %v849 = vpack.c.bf16 %v828, %v827
    %v850 = vpack.c.bf16 %v830, %v829
    %v851 = vpack.c.bf16 %v832, %v831
    %v852 = vpack.c.bf16 %v834, %v833
    %v853 = vpack.c.bf16 %v836, %v835
    %v854 = vpack.c.bf16 %v838, %v837
    %v855 = vpack.c.bf16 %v840, %v839
    %v856 = vpack.c.bf16 %v842, %v841
    %v857 = vpack.c.bf16 %v844, %v843
    %v858 = vpack.c.bf16 %v845, %v845
    %v859 = vld [vmem:[%s7] sm:$0xf]
    %v860 = vld [vmem:[%s7 + $0x4] sm:$0xf]
    %v861 = vld [vmem:[%s7 + $0x8] sm:$0xf]
    %v862 = vld [vmem:[%s7 + $0xc] sm:$0xf]
    %v863 = vld [vmem:[%s7 + $0x10] sm:$0xf]
    %v864 = vld [vmem:[%s7 + $0x14] sm:$0xf]
    %v865 = vld [vmem:[%s7 + $0x18] sm:$0xf]
    %v866 = vld [vmem:[%s7 + $0x1c] sm:$0xf]
    %v867 = vld [vmem:[%s8] sm:$0x1]
    %v869 = vperm.slane %v867, 0
    %v879 = vunpack.c.l.b16 %v859
    %v880 = vunpack.c.l.b16 %v860
    %v881 = vunpack.c.l.b16 %v861
    %v882 = vunpack.c.l.b16 %v862
    %v883 = vunpack.c.l.b16 %v863
    %v884 = vunpack.c.l.b16 %v864
    %v885 = vunpack.c.l.b16 %v865
    %v886 = vunpack.c.l.b16 %v866
    %v887 = vpack.c.b16 %v880, %v879
    %v888 = vpack.c.b16 %v882, %v881
    %v889 = vpack.c.b16 %v884, %v883
    %v890 = vpack.c.b16 %v886, %v885
    %vm895 = vcmask 523264
    %v897 = vsel %vm895, %v846, 0
    %v900 = vsel %vm895, %v847, 0
    %v903 = vsel %vm895, %v848, 0
    %v906 = vsel %vm895, %v849, 0
    %v909 = vsel %vm895, %v850, 0
    %v912 = vsel %vm895, %v851, 0
    %v915 = vsel %vm895, %v852, 0
    %v918 = vsel %vm895, %v853, 0
    %v921 = vsel %vm895, %v854, 0
    %v924 = vsel %vm895, %v855, 0
    %v927 = vsel %vm895, %v856, 0
    %v930 = vsel %vm895, %v857, 0
    %v933 = vsel %vm895, %v858, 0
    %935 = vmatpush.bf16.msra.mxu0 0
    %936 = vmatpush.bf16.msra.mxu0 0
    %937 = vmatpush.bf16.msra.mxu0 0
    %938 = vmatpush.bf16.msra.mxu0 0
    %939 = vmatpush.bf16.msra.mxu0 %v890
    %940 = vmatpush.bf16.msra.mxu0 %v889
    %941 = vmatpush.bf16.msra.mxu0 %v888
    %942 = vmatpush.bf16.msra.mxu0 %v887
    %943 = vmatmul.bf16.gmra.mxu0 %v897
    %v944 = vpop.f32.mrf.mxu0
    %v945 = vadd.f32 %v869, %v944
    %v946 = vpop.f32.mrf.mxu0
    %v947 = vadd.f32 %v869, %v946
    %948 = vmatmul.bf16.gmra.mxu0 %v900
    %v949 = vpop.f32.mrf.mxu0
    %v950 = vadd.f32 %v869, %v949
    %v951 = vpop.f32.mrf.mxu0
    %v952 = vadd.f32 %v869, %v951
    %953 = vmatmul.bf16.gmra.mxu0 %v903
    %v954 = vpop.f32.mrf.mxu0
    %v955 = vadd.f32 %v869, %v954
    %v956 = vpop.f32.mrf.mxu0
    %v957 = vadd.f32 %v869, %v956
    %958 = vmatmul.bf16.gmra.mxu0 %v906
    %v959 = vpop.f32.mrf.mxu0
    %v960 = vadd.f32 %v869, %v959
    %v961 = vpop.f32.mrf.mxu0
    %v962 = vadd.f32 %v869, %v961
    %963 = vmatmul.bf16.gmra.mxu0 %v909
    %v964 = vpop.f32.mrf.mxu0
    %v965 = vadd.f32 %v869, %v964
    %v966 = vpop.f32.mrf.mxu0
    %v967 = vadd.f32 %v869, %v966
    %968 = vmatmul.bf16.gmra.mxu0 %v912
    %v969 = vpop.f32.mrf.mxu0
    %v970 = vadd.f32 %v869, %v969
    %v971 = vpop.f32.mrf.mxu0
    %v972 = vadd.f32 %v869, %v971
    %973 = vmatmul.bf16.gmra.mxu0 %v915
    %v974 = vpop.f32.mrf.mxu0
    %v975 = vadd.f32 %v869, %v974
    %v976 = vpop.f32.mrf.mxu0
    %v977 = vadd.f32 %v869, %v976
    %978 = vmatmul.bf16.gmra.mxu0 %v918
    %v979 = vpop.f32.mrf.mxu0
    %v980 = vadd.f32 %v869, %v979
    %v981 = vpop.f32.mrf.mxu0
    %v982 = vadd.f32 %v869, %v981
    %983 = vmatmul.bf16.gmra.mxu0 %v921
    %v984 = vpop.f32.mrf.mxu0
    %v985 = vadd.f32 %v869, %v984
    %v986 = vpop.f32.mrf.mxu0
    %v987 = vadd.f32 %v869, %v986
    %988 = vmatmul.bf16.gmra.mxu0 %v924
    %v989 = vpop.f32.mrf.mxu0
    %v990 = vadd.f32 %v869, %v989
    %v991 = vpop.f32.mrf.mxu0
    %v992 = vadd.f32 %v869, %v991
    %993 = vmatmul.bf16.gmra.mxu0 %v927
    %v994 = vpop.f32.mrf.mxu0
    %v995 = vadd.f32 %v869, %v994
    %v996 = vpop.f32.mrf.mxu0
    %v997 = vadd.f32 %v869, %v996
    %998 = vmatmul.bf16.gmra.mxu0 %v930
    %v999 = vpop.f32.mrf.mxu0
    %v1000 = vadd.f32 %v869, %v999
    %v1001 = vpop.f32.mrf.mxu0
    %v1002 = vadd.f32 %v869, %v1001
    %1003 = vmatmul.bf16.gmra.mxu0 %v933
    %v1004 = vpop.f32.mrf.mxu0
    %v1005 = vadd.f32 %v869, %v1004
    %v1006 = vpop.f32.mrf.mxu0
    %1007 = vdwg.mxu0
    %1008 = vst [vmem:[#allocation2] sm:$0xff] %v945
    %1009 = vst [vmem:[#allocation2 + $0x8] sm:$0xff] %v947
    %1010 = vst [vmem:[#allocation2 + $0x10] sm:$0xff] %v950
    %1011 = vst [vmem:[#allocation2 + $0x18] sm:$0xff] %v952
    %1012 = vst [vmem:[#allocation2 + $0x20] sm:$0xff] %v955
    %1013 = vst [vmem:[#allocation2 + $0x28] sm:$0xff] %v957
    %1014 = vst [vmem:[#allocation2 + $0x30] sm:$0xff] %v960
    %1015 = vst [vmem:[#allocation2 + $0x38] sm:$0xff] %v962
    %1016 = vst [vmem:[#allocation2 + $0x40] sm:$0xff] %v965
    %1017 = vst [vmem:[#allocation2 + $0x48] sm:$0xff] %v967
    %1018 = vst [vmem:[#allocation2 + $0x50] sm:$0xff] %v970
    %1019 = vst [vmem:[#allocation2 + $0x58] sm:$0xff] %v972
    %1020 = vst [vmem:[#allocation2 + $0x60] sm:$0xff] %v975
    %1021 = vst [vmem:[#allocation2 + $0x68] sm:$0xff] %v977
    %1022 = vst [vmem:[#allocation2 + $0x70] sm:$0xff] %v980
    %1023 = vst [vmem:[#allocation2 + $0x78] sm:$0xff] %v982
    %1024 = vst [vmem:[#allocation2 + $0x80] sm:$0xff] %v985
    %1025 = vst [vmem:[#allocation2 + $0x88] sm:$0xff] %v987
    %1026 = vst [vmem:[#allocation2 + $0x90] sm:$0xff] %v990
    %1027 = vst [vmem:[#allocation2 + $0x98] sm:$0xff] %v992
    %1028 = vst [vmem:[#allocation2 + $0xa0] sm:$0xff] %v995
    %1029 = vst [vmem:[#allocation2 + $0xa8] sm:$0xff] %v997
    %1030 = vst [vmem:[#allocation2 + $0xb0] sm:$0xff] %v1000
    %1031 = vst [vmem:[#allocation2 + $0xb8] sm:$0xff] %v1002
    %1032 = vst [vmem:[#allocation2 + $0xc0] sm:$0xff] %v1005
    // Predicated region
    $region38: #{tpu_custom_call.1} parent=1 // pred_check
      _
    $region39: #{tpu_custom_call.1} parent=1 // pred_check_branch
      %1034 = sbr.rel (0) target = $region41
    $region40: #{tpu_custom_call.1} parent=1 // pred_region
      %1036 = vsyncadd [#allocation3], 0
      %s1037 = sshll.u32 [#allocation2], 4
      %s1038 = int_to_ptr.vmem [resolvable:$true] %s1037
      %s1039 = sshll.u32 %s9, 4
      %s1040 = int_to_ptr.hbm [resolvable:$true] %s1039
      %1045 = dma.vmem_to_hbm [thread:$0]  %s1038, 3200, %s1040, [#allocation3], 128, 128, 8
    $region41: #{tpu_custom_call.1} parent=1 // pred_fallthru
      _
    // Predicated region
    $region42: #{tpu_custom_call.1} parent=1 // pred_check
      _
    $region43: #{tpu_custom_call.1} parent=1 // pred_check_branch
      %1047 = sbr.rel (0) target = $region45
    $region44: #{tpu_custom_call.1} parent=1 // pred_region
      %1049 = dma.done [#allocation3], 3200
    $region45: #{tpu_custom_call.1} parent=1 // pred_fallthru
      _
    %1050 = vsyncpa [#allocation3], 1

</llo_original>
